<compile_context>
chip_gen: v5e
topology: v5e:2x2
jax: 0.10.0
libtpu: 0.0.40
codegen_flags: <defaults>
</compile_context>

<pallas_src>
import functools

import jax
import jax.numpy as jnp
from jax import lax
from jax.experimental import pallas as pl
from jax.experimental.pallas import tpu as pltpu

EPS = 1e-5


def stock_kernel(xt_ref, w_ref, b_ref, ot_ref, *, gamma, lrelu, inv_b):
    # xt_ref: (4, B) f32  (batch on lanes)     w_ref: (O, 4) f32 (PyTorch-native)
    # b_ref : (O, 1) f32                       ot_ref: (O, B) f32 (lane-dense out)
    xt = xt_ref[...]
    w = w_ref[...]

    # Linear(4 -> O): unrolled K=4 broadcast-FMA on the VPU (no MXU latency).
    h = w[:, 0:1] * xt[0:1, :]
    h = h + w[:, 1:2] * xt[1:2, :]
    h = h + w[:, 2:3] * xt[2:3, :]
    h = h + w[:, 3:4] * xt[3:4, :]
    h = h + b_ref[...]                                    # (O, B)

    # BatchNorm1d, training mode: per-feature batch mean / biased batch variance.
    # Batch axis is the lane axis here -> cross-lane reduce on the XLU.
    m = jnp.sum(h, axis=1, keepdims=True) * inv_b         # (O, 1)
    d = h - m                                             # reused for var AND normalize
    var = jnp.sum(d * d, axis=1, keepdims=True) * inv_b   # (O, 1) biased variance
    inv = lax.rsqrt(var + EPS)                            # EUP

    if 0.0 <= lrelu <= 1.0:
        act = lambda z: jnp.maximum(z, lrelu * z)         # mul + max (2 VPU ops)
    else:
        act = lambda z: jnp.where(z >= 0, z, lrelu * z)   # general fallback

    if gamma >= 0.0:
        # LeakyReLU(z)*g == LeakyReLU(z*g) for g >= 0: fold gamma into the
        # per-feature (O,1) scale instead of an extra (O,B) mul.
        hn = d * (inv * gamma)
        ot_ref[...] = act(hn)
    else:
        hn = d * inv
        ot_ref[...] = act(hn) * gamma


def stock_forward(x, w, b, *, gamma, lrelu=0.1):
    """x: (B, 4) f32,  w: (O, 4) f32 (PyTorch Linear weight),  b: (O,) f32.

    Returns (B, O) f32, matching StockModule.forward in training mode.
    """
    B = x.shape[0]
    O = w.shape[0]

    # Layout plumbing stays in the wrapper: batch -> lanes, output lane-dense.
    xt = jnp.transpose(x)            # (4, B)
    b_col = b.reshape(O, 1)          # (O, 1)

    vmem = pl.BlockSpec(memory_space=pltpu.MemorySpace.VMEM)
    kernel = functools.partial(
        stock_kernel, gamma=float(gamma), lrelu=float(lrelu), inv_b=1.0 / float(B))
    cost = pl.CostEstimate(
        flops=10 * B * O,                                  # FMA chain + BN + act
        transcendentals=O,                                 # rsqrt per feature
        bytes_accessed=(4 * B + 4 * O + O + B * O) * 4,
    )

    out_t = pl.pallas_call(
        kernel,
        out_shape=jax.ShapeDtypeStruct((O, B), jnp.float32),
        in_specs=[vmem, vmem, vmem],
        out_specs=vmem,
        cost_estimate=cost,
    )(xt, w, b_col)

    return jnp.transpose(out_t)      # back to (B, O) module contract


def stock_reference(x, w, b, *, gamma, lrelu=0.1):
    """Pure-JAX reference — identical math to the PyTorch module in training mode."""
    h = x @ w.T + b
    m = jnp.mean(h, axis=0, keepdims=True)
    var = jnp.mean((h - m) ** 2, axis=0, keepdims=True)
    hn = (h - m) * lax.rsqrt(var + EPS)
    return jnp.where(hn >= 0, hn, lrelu * hn) * gamma


if __name__ == "__main__":
    # Small shapes implied by the forward: x is (batch, 4); outputs=4.
    B, O = 8, 4
    GAMMA, LRELU = 0.9, 0.1

    key = jax.random.PRNGKey(0)
    kx, kw, kb = jax.random.split(key, 3)
    x = jax.random.normal(kx, (B, 4), jnp.float32)
    # PyTorch Linear(4, O): weight is (O, 4), bias is (O,) — used natively.
    w = 0.5 * jax.random.normal(kw, (O, 4), jnp.float32)
    b = 0.1 * jax.random.normal(kb, (O,), jnp.float32)

    out = stock_forward(x, w, b, gamma=GAMMA, lrelu=LRELU)
    out = jax.block_until_ready(out)

    ref = stock_reference(x, w, b, gamma=GAMMA, lrelu=LRELU)
    assert out.shape == (B, O), out.shape
    assert jnp.allclose(out, ref, atol=1e-5, rtol=1e-5), (
        "mismatch vs reference: max abs err = "
        f"{float(jnp.max(jnp.abs(out - ref)))}")

    print("KERNEL_OK")
</pallas_src>

<mosaic_0001>
module attributes {stable_mosaic.version = 11 : i64} {
  func.func @stock_kernel(%arg0: memref<4x8xf32, #tpu.memory_space<vmem>>, %arg1: memref<4x4xf32, #tpu.memory_space<vmem>>, %arg2: memref<4x1xf32, #tpu.memory_space<vmem>>, %arg3: memref<4x8xf32, #tpu.memory_space<vmem>>) attributes {dimension_semantics = [], scalar_prefetch = 0 : i64, scratch_operands = 0 : i64, tpu.core_type = #tpu.core_type<tc>} {
    %c0 = arith.constant 0 : index
    %c0_0 = arith.constant 0 : index
    %0 = vector.load %arg0[%c0, %c0_0] : memref<4x8xf32, #tpu.memory_space<vmem>>, vector<4x8xf32>
    %c0_1 = arith.constant 0 : index
    %c0_2 = arith.constant 0 : index
    %1 = vector.load %arg1[%c0_1, %c0_2] : memref<4x4xf32, #tpu.memory_space<vmem>>, vector<4x4xf32>
    %2 = vector.extract_strided_slice %1 {offsets = [0, 0], sizes = [4, 1], strides = [1, 1]} : vector<4x4xf32> to vector<4x1xf32>
    %3 = vector.extract_strided_slice %0 {offsets = [0, 0], sizes = [1, 8], strides = [1, 1]} : vector<4x8xf32> to vector<1x8xf32>
    %4 = vector.broadcast %2 : vector<4x1xf32> to vector<4x8xf32>
    %5 = vector.broadcast %3 : vector<1x8xf32> to vector<4x8xf32>
    %6 = arith.mulf %4, %5 : vector<4x8xf32>
    %7 = vector.extract_strided_slice %1 {offsets = [0, 1], sizes = [4, 1], strides = [1, 1]} : vector<4x4xf32> to vector<4x1xf32>
    %8 = vector.extract_strided_slice %0 {offsets = [1, 0], sizes = [1, 8], strides = [1, 1]} : vector<4x8xf32> to vector<1x8xf32>
    %9 = vector.broadcast %7 : vector<4x1xf32> to vector<4x8xf32>
    %10 = vector.broadcast %8 : vector<1x8xf32> to vector<4x8xf32>
    %11 = arith.mulf %9, %10 : vector<4x8xf32>
    %12 = arith.addf %6, %11 : vector<4x8xf32>
    %13 = vector.extract_strided_slice %1 {offsets = [0, 2], sizes = [4, 1], strides = [1, 1]} : vector<4x4xf32> to vector<4x1xf32>
    %14 = vector.extract_strided_slice %0 {offsets = [2, 0], sizes = [1, 8], strides = [1, 1]} : vector<4x8xf32> to vector<1x8xf32>
    %15 = vector.broadcast %13 : vector<4x1xf32> to vector<4x8xf32>
    %16 = vector.broadcast %14 : vector<1x8xf32> to vector<4x8xf32>
    %17 = arith.mulf %15, %16 : vector<4x8xf32>
    %18 = arith.addf %12, %17 : vector<4x8xf32>
    %19 = vector.extract_strided_slice %1 {offsets = [0, 3], sizes = [4, 1], strides = [1, 1]} : vector<4x4xf32> to vector<4x1xf32>
    %20 = vector.extract_strided_slice %0 {offsets = [3, 0], sizes = [1, 8], strides = [1, 1]} : vector<4x8xf32> to vector<1x8xf32>
    %21 = vector.broadcast %19 : vector<4x1xf32> to vector<4x8xf32>
    %22 = vector.broadcast %20 : vector<1x8xf32> to vector<4x8xf32>
    %23 = arith.mulf %21, %22 : vector<4x8xf32>
    %24 = arith.addf %18, %23 : vector<4x8xf32>
    %c0_3 = arith.constant 0 : index
    %c0_4 = arith.constant 0 : index
    %25 = vector.load %arg2[%c0_3, %c0_4] : memref<4x1xf32, #tpu.memory_space<vmem>>, vector<4x1xf32>
    %26 = vector.broadcast %25 : vector<4x1xf32> to vector<4x8xf32>
    %27 = arith.addf %24, %26 : vector<4x8xf32>
    %cst = arith.constant dense<0.000000e+00> : vector<4xf32>
    %28 = vector.multi_reduction <add>, %27, %cst [1] : vector<4x8xf32> to vector<4xf32>
    %29 = vector.shape_cast %28 : vector<4xf32> to vector<4x1xf32>
    %cst_5 = arith.constant 1.250000e-01 : f32
    %30 = vector.broadcast %cst_5 : f32 to vector<4x1xf32>
    %31 = arith.mulf %29, %30 : vector<4x1xf32>
    %32 = vector.broadcast %31 : vector<4x1xf32> to vector<4x8xf32>
    %33 = arith.subf %27, %32 : vector<4x8xf32>
    %34 = arith.mulf %33, %33 : vector<4x8xf32>
    %cst_6 = arith.constant dense<0.000000e+00> : vector<4xf32>
    %35 = vector.multi_reduction <add>, %34, %cst_6 [1] : vector<4x8xf32> to vector<4xf32>
    %36 = vector.shape_cast %35 : vector<4xf32> to vector<4x1xf32>
    %cst_7 = arith.constant 1.250000e-01 : f32
    %37 = vector.broadcast %cst_7 : f32 to vector<4x1xf32>
    %38 = arith.mulf %36, %37 : vector<4x1xf32>
    %cst_8 = arith.constant 9.99999974E-6 : f32
    %39 = vector.broadcast %cst_8 : f32 to vector<4x1xf32>
    %40 = arith.addf %38, %39 : vector<4x1xf32>
    %41 = math.rsqrt %40 : vector<4x1xf32>
    %cst_9 = arith.constant 0.899999976 : f32
    %42 = vector.broadcast %cst_9 : f32 to vector<4x1xf32>
    %43 = arith.mulf %41, %42 : vector<4x1xf32>
    %44 = vector.broadcast %43 : vector<4x1xf32> to vector<4x8xf32>
    %45 = arith.mulf %33, %44 : vector<4x8xf32>
    %cst_10 = arith.constant 1.000000e-01 : f32
    %46 = vector.broadcast %cst_10 : f32 to vector<4x8xf32>
    %47 = arith.mulf %46, %45 : vector<4x8xf32>
    %48 = arith.maximumf %45, %47 : vector<4x8xf32>
    %c0_11 = arith.constant 0 : index
    %c0_12 = arith.constant 0 : index
    %49 = vector.load %arg3[%c0_11, %c0_12] : memref<4x8xf32, #tpu.memory_space<vmem>>, vector<4x8xf32>
    tpu.vector_store %arg3[%c0_11, %c0_12], %48 {strides = array<i32>} : memref<4x8xf32, #tpu.memory_space<vmem>>, vector<4x8xf32>,
    return
  }
}

</mosaic_0001>

<llo_original>
// kernel: tpu_custom_call.1
$region0: #{tpu_custom_call.1}
  #allocation0 [shape = 'u32[]', space=smem, size = 0x4, offset = 0x4, fixed_abs, tag = 'smem constant byte address 0x4 - core index']
  #allocation1 [shape = 'u32[72,128]{1,0:T(1,128)}', space=vmem, size = 0x9000, scoped, tag = 'internal scratch']
  %s0 = inlined_call_operand.vmem [shape: f32[4,8], index: 0, kind: input, shape index: {}]
  %s1 = inlined_call_operand.hbm [shape: f32[4,4], index: 1, kind: input, shape index: {}]
  %s2 = inlined_call_operand.vmem [shape: f32[4,1], index: 2, kind: input, shape index: {}]
  %s3 = inlined_call_operand.hbm [shape: f32[4,8], index: 3, kind: output, shape index: {}]
  %s4 = sld [smem:[#allocation0]]
  $region26: #{tpu_custom_call.1} parent=0
    _
  %s6 = ssub.s32 1, %s4
  %s7 = scalar_select 0, %s6, %s4
  $region1: #{tpu_custom_call.1} parent=0
    #allocation2 [shape = 'u8[2048]{0}', space=vmem, size = 0x800, scoped, tag = 'input window, operand 1, single buffered']
    #allocation3 [shape = 's32[1]{0}', space=sflag, size = 0x4, scoped, tag = 'scoped memory for tpu_custom_call.1']
    #allocation4 [shape = 's32[1]{0}', space=sflag, size = 0x4, scoped, tag = 'scoped memory for tpu_custom_call.1']
    #allocation5 [shape = 'u8[2048]{0}', space=vmem, size = 0x800, scoped, tag = 'output window, operand 0, single buffered']
    %8 = vsyncpa [#allocation3], 0
    %9 = vsyncpa [#allocation4], 0
    // Predicated region
    $region2: #{tpu_custom_call.1} parent=1 // pred_check
      _
    $region3: #{tpu_custom_call.1} parent=1 // pred_check_branch
      %11 = sbr.rel (0) target = $region5
    $region4: #{tpu_custom_call.1} parent=1 // pred_region
      _
    $region5: #{tpu_custom_call.1} parent=1 // pred_fallthru
      _
    // Predicated region
    $region6: #{tpu_custom_call.1} parent=1 // pred_check
      _
    $region7: #{tpu_custom_call.1} parent=1 // pred_check_branch
      %13 = sbr.rel (0) target = $region9
    $region8: #{tpu_custom_call.1} parent=1 // pred_region
      %15 = vsyncadd [#allocation3], 0
      %s17 = sshll.u32 %s1, 4
      %s18 = int_to_ptr.hbm [resolvable:$true] %s17
      %s19 = sshll.u32 [#allocation2], 4
      %s20 = int_to_ptr.vmem [resolvable:$true] %s19
      %22 = dma.hbm_to_vmem [thread:$0]  %s18, 64, %s20, [#allocation3]
    $region9: #{tpu_custom_call.1} parent=1 // pred_fallthru
      _
    // Predicated region
    $region10: #{tpu_custom_call.1} parent=1 // pred_check
      _
    $region11: #{tpu_custom_call.1} parent=1 // pred_check_branch
      %24 = sbr.rel (0) target = $region13
    $region12: #{tpu_custom_call.1} parent=1 // pred_region
      _
    $region13: #{tpu_custom_call.1} parent=1 // pred_fallthru
      _
    // Predicated region
    $region14: #{tpu_custom_call.1} parent=1 // pred_check
      _
    $region15: #{tpu_custom_call.1} parent=1 // pred_check_branch
      %26 = sbr.rel (0) target = $region17
    $region16: #{tpu_custom_call.1} parent=1 // pred_region
      %28 = dma.done [#allocation3], 64
    $region17: #{tpu_custom_call.1} parent=1 // pred_fallthru
      _
    %v29 = vld [vmem:[%s0] sm:$0xf]
    %v30 = vld [vmem:[#allocation2] sm:$0xf]
    %32 = vset.pattern.permute.xlu0 0
    %33 = vperm.xlu0 %32, %v30
    %v34 = vpop.permute.xlu0 %33
    %v36 = vperm.slane %v29, 0
    %v37 = vmul.f32 %v34, %v36
    %38 = vset.pattern.permute.xlu0 1
    %39 = vperm.xlu0 %38, %v30
    %v40 = vpop.permute.xlu0 %39
    %v42 = vperm.slane %v29, 1
    %v43 = vmul.f32 %v40, %v42
    %v44 = vadd.f32 %v37, %v43
    %45 = vset.pattern.permute.xlu0 2
    %46 = vperm.xlu0 %45, %v30
    %v47 = vpop.permute.xlu0 %46
    %v49 = vperm.slane %v29, 2
    %v50 = vmul.f32 %v47, %v49
    %v51 = vadd.f32 %v44, %v50
    %52 = vset.pattern.permute.xlu0 3
    %53 = vperm.xlu0 %52, %v30
    %v54 = vpop.permute.xlu0 %53
    %v56 = vperm.slane %v29, 3
    %v57 = vmul.f32 %v54, %v56
    %v58 = vadd.f32 %v51, %v57
    %v59 = vld [vmem:[%s2] sm:$0xf]
    %61 = vset.pattern.permute.xlu0 0
    %62 = vperm.xlu0 %61, %v59
    %v63 = vpop.permute.xlu0 %62
    %v65 = vadd.f32 %v58, %v63
    %vm66 = vcmask 60416
    %v67 = vsel %vm66, %v65, 0.0
    %68 = vadd.xlane.f32.xlu0 %v67
    %v69 = vpop.xlane.xlu0 %68
    %v70 = vmul.f32 %v69, 0.125
    %v71 = vsub.f32 %v65, %v70
    %v72 = vmul.f32 %v71, %v71
    %v73 = vsel %vm66, %v72, 0.0
    %74 = vadd.xlane.f32.xlu0 %v73
    %v75 = vpop.xlane.xlu0 %74
    %v76 = vmul.f32 %v75, 0.125
    %v77 = vadd.f32 %v76, 1e-05
    %v78 = vrsqrt.pop %v77
    %v79 = vmul.f32 %v78, %v77
    %v80 = vmul.f32 %v79, %v78
    %v81 = vmul.f32 0.5, %v80
    %v82 = vsub.f32 1.5, %v81
    %v83 = vmul.f32 %v78, %v82
    %vm84 = vweird.f32 %v77
    %vm85 = vweird.f32 %v78
    %vm86 = vmor %vm84, %vm85
    %v87 = vsel %vm86, %v78, %v83
    %v88 = vmul.f32 %v87, 0.9
    %v89 = vmul.f32 %v71, %v88
    %v90 = vmul.f32 %v89, 0.1
    %v91 = vmax.f32 %v89, %v90
    %92 = vst.msk [vmem:[#allocation5] sm:$0xf] %vm66, %v91
    // Predicated region
    $region18: #{tpu_custom_call.1} parent=1 // pred_check
      _
    $region19: #{tpu_custom_call.1} parent=1 // pred_check_branch
      %94 = sbr.rel (0) target = $region21
    $region20: #{tpu_custom_call.1} parent=1 // pred_region
      %96 = vsyncadd [#allocation4], 0
      %s98 = sshll.u32 [#allocation5], 4
      %s99 = int_to_ptr.vmem [resolvable:$true] %s98
      %s100 = sshll.u32 %s3, 4
      %s101 = int_to_ptr.hbm [resolvable:$true] %s100
      %103 = dma.vmem_to_hbm [thread:$0]  %s99, 64, %s101, [#allocation4]
    $region21: #{tpu_custom_call.1} parent=1 // pred_fallthru
      _
    // Predicated region
    $region22: #{tpu_custom_call.1} parent=1 // pred_check
      _
    $region23: #{tpu_custom_call.1} parent=1 // pred_check_branch
      %105 = sbr.rel (0) target = $region25
    $region24: #{tpu_custom_call.1} parent=1 // pred_region
      %107 = dma.done [#allocation4], 64
    $region25: #{tpu_custom_call.1} parent=1 // pred_fallthru
      _
    %108 = vsyncpa [#allocation3], 1
    %109 = vsyncpa [#allocation4], 1

</llo_original>
